<compile_context>
chip_gen: v7x
topology: tpu7x:2x2x1
jax: 0.10.0
libtpu: 0.0.40
codegen_flags: <defaults>
</compile_context>

<pallas_src>
import jax
import jax.numpy as jnp
import numpy as np
from jax.experimental import pallas as pl
from jax.experimental.pallas import tpu as pltpu

P_LATENT = 1000   # torch latent width (only appears in parameter prep now)


def _round_up(x, m):
    return (x + m - 1) // m * m


# ----------------------------------------------------------------------------
# Kernel: one merged (refolded) DeepONet forward per batch tile.
# ----------------------------------------------------------------------------
def _possion_kernel(bx_ref, tx_ref, w1_ref, w2_ref, w3_ref, w4_ref,
                    bias_ref, W_ref, c_ref, out_ref):
    f32 = jnp.float32
    ft = tx_ref.shape[1]

    # First trunk layer.  K = trunk_features is tiny (2), so use VPU FMAs and
    # skip an MXU fill/drain round trip; fall back to the MXU if K is larger.
    if ft <= 8:
        z = bias_ref[0:1, :]
        for i in range(ft):
            z = z + tx_ref[:, i:i + 1] * w1_ref[i:i + 1, :]
    else:
        z = jnp.dot(tx_ref[...], w1_ref[...], preferred_element_type=f32) + bias_ref[0:1, :]
    h = jnp.tanh(z)

    # Hidden layers: dense 128x128 MXU tiles (block-diag merged, zero-padded).
    h = jnp.tanh(jnp.dot(h, w2_ref[...], preferred_element_type=f32) + bias_ref[1:2, :])
    h = jnp.tanh(jnp.dot(h, w3_ref[...], preferred_element_type=f32) + bias_ref[2:3, :])
    h = jnp.tanh(jnp.dot(h, w4_ref[...], preferred_element_type=f32) + bias_ref[3:4, :])

    # Refolded final contraction: reduce over branch-feature lanes (<=128),
    # not the 2*1024 latent lanes.
    t = jnp.dot(h, W_ref[...], preferred_element_type=f32) + c_ref[...]   # (TB, FB_PAD)
    res = jnp.sum(bx_ref[...] * t, axis=1, keepdims=True)                  # (TB, 1)

    # Lane-dense unmasked store; wrapper reads lane 0.
    out_ref[...] = jnp.broadcast_to(res, out_ref.shape)


# ----------------------------------------------------------------------------
# Wrapper
# ----------------------------------------------------------------------------
def possion_onet_forward(branch1_input, branch2_input, trunk_input, merged):
    """merged = output of merge_params(params1, params2)."""
    w1, w2, w3, w4, bias_stack, W, cvec = merged
    batch = branch1_input.shape[0]
    fb = branch1_input.shape[1] + branch2_input.shape[1]
    fb_pad = W.shape[1]

    bx = jnp.concatenate([branch1_input, branch2_input], axis=1).astype(jnp.float32)
    bx = jnp.pad(bx, ((0, 0), (0, fb_pad - fb)))
    tx = trunk_input.astype(jnp.float32)

    # Batch tiling: one tile when small; 256/512-row tiles (>=2 grid steps so
    # v7x's second TensorCore can be used) when large.
    batch_pad = _round_up(batch, 8)
    if batch_pad >= 1024:
        tb = 512
    elif batch_pad >= 512:
        tb = 256
    else:
        tb = batch_pad
    batch_pad = _round_up(batch_pad, tb)
    if batch_pad != batch:
        bx = jnp.pad(bx, ((0, batch_pad - batch), (0, 0)))
        tx = jnp.pad(tx, ((0, batch_pad - batch), (0, 0)))

    ft = tx.shape[1]
    grid = (batch_pad // tb,)

    def const_spec(arr):
        # Full-array block, constant index map -> stays VMEM-resident across
        # batch tiles.
        return pl.BlockSpec(arr.shape, lambda i: (0,) * arr.ndim)

    out = pl.pallas_call(
        _possion_kernel,
        out_shape=jax.ShapeDtypeStruct((batch_pad, 128), jnp.float32),
        grid=grid,
        in_specs=[
            pl.BlockSpec((tb, fb_pad), lambda i: (i, 0)),   # padded concat branch inputs
            pl.BlockSpec((tb, ft), lambda i: (i, 0)),       # trunk input
            const_spec(w1), const_spec(w2), const_spec(w3), const_spec(w4),
            const_spec(bias_stack), const_spec(W), const_spec(cvec),
        ],
        out_specs=pl.BlockSpec((tb, 128), lambda i: (i, 0)),
        compiler_params=pltpu.CompilerParams(dimension_semantics=("parallel",)),
    )(bx, tx, w1, w2, w3, w4, bias_stack, W, cvec)

    return out[:batch, :1]


# ----------------------------------------------------------------------------
# Parameter construction (torch layout -> (in, out) weights, (1, C) biases)
# ----------------------------------------------------------------------------
def make_net_params(key, branch_features, trunk_features, common_features):
    keys = jax.random.split(key, 12)
    s = 0.1

    def w(k, shape):
        return jax.random.normal(k, shape, dtype=jnp.float32) * s

    wb = w(keys[0], (branch_features, P_LATENT))                   # branch Linear (no bias)
    w1 = w(keys[1], (trunk_features, common_features))
    b1 = w(keys[2], (1, common_features))
    w2 = w(keys[3], (common_features, common_features))
    b2 = w(keys[4], (1, common_features))
    w3 = w(keys[5], (common_features, common_features))
    b3 = w(keys[6], (1, common_features))
    w4 = w(keys[7], (common_features, common_features))
    b4 = w(keys[8], (1, common_features))
    w5 = w(keys[9], (common_features, P_LATENT))
    b5 = w(keys[10], (1, P_LATENT))
    last = jax.random.normal(keys[11], (1, P_LATENT), dtype=jnp.float32)   # torch.randn(1000)
    return [wb, w1, b1, w2, b2, w3, b3, w4, b4, w5, b5, last]


def merge_params(params1, params2):
    """One-time transform: block-diag merge the two nets, pad hidden width to
    128, and REFOLD the latent contraction:
        W_i = (w5_i * last_i) @ wb_i.T,   c_i = (b5_i * last_i) @ wb_i.T
    so the kernel never touches the 1000-wide latent dim."""
    wb1, w11, b11, w21, b21, w31, b31, w41, b41, w51, b51, last1 = params1
    wb2, w12, b12, w22, b22, w32, b32, w42, b42, w52, b52, last2 = params2
    fb1, fb2 = wb1.shape[0], wb2.shape[0]
    c1, c2 = w11.shape[1], w12.shape[1]
    ft = w11.shape[0]

    H = c1 + c2
    FB = fb1 + fb2
    H_PAD = _round_up(H, 128)
    FB_PAD = _round_up(FB, 128)
    hi = jax.lax.Precision.HIGHEST

    def blkdiag(a, b, rows, cols):
        out = jnp.zeros((rows, cols), jnp.float32)
        out = out.at[:a.shape[0], :a.shape[1]].set(a)
        out = out.at[a.shape[0]:a.shape[0] + b.shape[0],
                     a.shape[1]:a.shape[1] + b.shape[1]].set(b)
        return out

    # Refolded final-layer weights / biases (latent dim contracted away).
    W1 = jnp.dot(w51 * last1, wb1.T, precision=hi)        # (c1, fb1)
    W2 = jnp.dot(w52 * last2, wb2.T, precision=hi)        # (c2, fb2)
    cv1 = jnp.dot(b51 * last1, wb1.T, precision=hi)       # (1, fb1)
    cv2 = jnp.dot(b52 * last2, wb2.T, precision=hi)       # (1, fb2)

    W = blkdiag(W1, W2, H_PAD, FB_PAD)
    cvec = jnp.zeros((1, FB_PAD), jnp.float32)
    cvec = cvec.at[:, :fb1].set(cv1).at[:, fb1:FB].set(cv2)

    # Trunk weights (hidden width padded to H_PAD = 128; padded units are
    # exact zeros end to end).
    w1 = jnp.zeros((ft, H_PAD), jnp.float32)
    w1 = w1.at[:, :c1].set(w11).at[:, c1:H].set(w12)
    w2 = blkdiag(w21, w22, H_PAD, H_PAD)
    w3 = blkdiag(w31, w32, H_PAD, H_PAD)
    w4 = blkdiag(w41, w42, H_PAD, H_PAD)

    bias_stack = jnp.zeros((4, H_PAD), jnp.float32)
    for row, (ba, bb) in enumerate([(b11, b12), (b21, b22), (b31, b32), (b41, b42)]):
        bias_stack = bias_stack.at[row, :c1].set(ba[0]).at[row, c1:H].set(bb[0])

    return (w1, w2, w3, w4, bias_stack, W, cvec)


# ----------------------------------------------------------------------------
# Pure-JAX reference (mirrors the PyTorch forward, unmerged params)
# ----------------------------------------------------------------------------
def reference_forward(branch1_input, branch2_input, trunk_input, params1, params2):
    def one_net(bx, tx, p):
        wb, w1, b1, w2, b2, w3, b3, w4, b4, w5, b5, last = p
        branch = bx @ wb
        h = jnp.tanh(tx @ w1 + b1)
        h = jnp.tanh(h @ w2 + b2)
        h = jnp.tanh(h @ w3 + b3)
        h = jnp.tanh(h @ w4 + b4)
        trunk = h @ w5 + b5
        return jnp.sum(branch * trunk * last, axis=1, keepdims=True)

    return (one_net(branch1_input, trunk_input, params1)
            + one_net(branch2_input, trunk_input, params2))


if __name__ == "__main__":
    batch = 8
    branch1_features = 12
    branch2_features = 10
    trunk_features = 2            # (x, y) coordinates for the 2-D Helmholtz problem
    common_features1 = 32
    common_features2 = 48

    key = jax.random.PRNGKey(0)
    k_in1, k_in2, k_tr, k_p1, k_p2 = jax.random.split(key, 5)

    branch1_input = jax.random.normal(k_in1, (batch, branch1_features), dtype=jnp.float32)
    branch2_input = jax.random.normal(k_in2, (batch, branch2_features), dtype=jnp.float32)
    trunk_input = jax.random.normal(k_tr, (batch, trunk_features), dtype=jnp.float32)

    params1 = make_net_params(k_p1, branch1_features, trunk_features, common_features1)
    params2 = make_net_params(k_p2, branch2_features, trunk_features, common_features2)

    # One-time parameter transform (outside the per-call path).
    merged = merge_params(params1, params2)
    merged = jax.tree_util.tree_map(jax.block_until_ready, merged)

    fwd = jax.jit(possion_onet_forward)
    out = fwd(branch1_input, branch2_input, trunk_input, merged)
    out = jax.block_until_ready(out)

    ref = reference_forward(branch1_input, branch2_input, trunk_input, params1, params2)
    assert out.shape == (batch, 1), out.shape
    np.testing.assert_allclose(np.asarray(out), np.asarray(ref), rtol=1e-3, atol=1e-3)

    print("KERNEL_OK")
</pallas_src>

<mosaic_0001>
module attributes {stable_mosaic.version = 11 : i64} {
  func.func @_possion_kernel(%arg0: i32, %arg1: memref<8x128xf32, #tpu.memory_space<vmem>>, %arg2: memref<8x2xf32, #tpu.memory_space<vmem>>, %arg3: memref<2x128xf32, #tpu.memory_space<vmem>>, %arg4: memref<128x128xf32, #tpu.memory_space<vmem>>, %arg5: memref<128x128xf32, #tpu.memory_space<vmem>>, %arg6: memref<128x128xf32, #tpu.memory_space<vmem>>, %arg7: memref<4x128xf32, #tpu.memory_space<vmem>>, %arg8: memref<128x128xf32, #tpu.memory_space<vmem>>, %arg9: memref<1x128xf32, #tpu.memory_space<vmem>>, %arg10: memref<8x128xf32, #tpu.memory_space<vmem>>) attributes {dimension_semantics = [#tpu.dimension_semantics<parallel>], iteration_bounds = array<i64: 1>, scalar_prefetch = 0 : i64, scratch_operands = 0 : i64, tpu.core_type = #tpu.core_type<tc>, window_params = [{transform_indices = @transform_0, window_bounds = array<i64: 8, 128>}, {transform_indices = @transform_1, window_bounds = array<i64: 8, 2>}, {pipeline_mode = #tpu.pipeline_mode<synchronous>, transform_indices = @transform_2, window_bounds = array<i64: 2, 128>}, {pipeline_mode = #tpu.pipeline_mode<synchronous>, transform_indices = @transform_3, window_bounds = array<i64: 128, 128>}, {pipeline_mode = #tpu.pipeline_mode<synchronous>, transform_indices = @transform_4, window_bounds = array<i64: 128, 128>}, {pipeline_mode = #tpu.pipeline_mode<synchronous>, transform_indices = @transform_5, window_bounds = array<i64: 128, 128>}, {pipeline_mode = #tpu.pipeline_mode<synchronous>, transform_indices = @transform_6, window_bounds = array<i64: 4, 128>}, {pipeline_mode = #tpu.pipeline_mode<synchronous>, transform_indices = @transform_7, window_bounds = array<i64: 128, 128>}, {pipeline_mode = #tpu.pipeline_mode<synchronous>, transform_indices = @transform_8, window_bounds = array<i64: 1, 128>}, {transform_indices = @transform_9, window_bounds = array<i64: 8, 128>}]} {
    %c0 = arith.constant 0 : index
    %c0_0 = arith.constant 0 : index
    %0 = vector.load %arg7[%c0, %c0_0] : memref<4x128xf32, #tpu.memory_space<vmem>>, vector<1x128xf32>
    %c0_1 = arith.constant 0 : index
    %c0_2 = arith.constant 0 : index
    %1 = vector.load %arg2[%c0_1, %c0_2] : memref<8x2xf32, #tpu.memory_space<vmem>>, vector<8x1xf32>
    %c0_3 = arith.constant 0 : index
    %c0_4 = arith.constant 0 : index
    %2 = vector.load %arg3[%c0_3, %c0_4] : memref<2x128xf32, #tpu.memory_space<vmem>>, vector<1x128xf32>
    %3 = vector.broadcast %1 : vector<8x1xf32> to vector<8x128xf32>
    %4 = vector.broadcast %2 : vector<1x128xf32> to vector<8x128xf32>
    %5 = arith.mulf %3, %4 : vector<8x128xf32>
    %6 = vector.broadcast %0 : vector<1x128xf32> to vector<8x128xf32>
    %7 = arith.addf %6, %5 : vector<8x128xf32>
    %c0_5 = arith.constant 0 : index
    %c1 = arith.constant 1 : index
    %8 = vector.load %arg2[%c0_5, %c1] : memref<8x2xf32, #tpu.memory_space<vmem>>, vector<8x1xf32>
    %c1_6 = arith.constant 1 : index
    %c0_7 = arith.constant 0 : index
    %9 = vector.load %arg3[%c1_6, %c0_7] : memref<2x128xf32, #tpu.memory_space<vmem>>, vector<1x128xf32>
    %10 = vector.broadcast %8 : vector<8x1xf32> to vector<8x128xf32>
    %11 = vector.broadcast %9 : vector<1x128xf32> to vector<8x128xf32>
    %12 = arith.mulf %10, %11 : vector<8x128xf32>
    %13 = arith.addf %7, %12 : vector<8x128xf32>
    %14 = math.tanh %13 : vector<8x128xf32>
    %c0_8 = arith.constant 0 : index
    %c0_9 = arith.constant 0 : index
    %15 = vector.load %arg4[%c0_8, %c0_9] : memref<128x128xf32, #tpu.memory_space<vmem>>, vector<128x128xf32>
    %cst = arith.constant dense<0.000000e+00> : vector<8x128xf32>
    %16 = tpu.matmul %14, %15, %cst {dimension_numbers = #tpu.dot_dimension_numbers<[1], [0], [0], [1], [0, 0, 1, 1], [], []>} : vector<8x128xf32>, vector<128x128xf32>, vector<8x128xf32> -> vector<8x128xf32>
    %c1_10 = arith.constant 1 : index
    %c0_11 = arith.constant 0 : index
    %17 = vector.load %arg7[%c1_10, %c0_11] : memref<4x128xf32, #tpu.memory_space<vmem>>, vector<1x128xf32>
    %18 = vector.broadcast %17 : vector<1x128xf32> to vector<8x128xf32>
    %19 = arith.addf %16, %18 : vector<8x128xf32>
    %20 = math.tanh %19 : vector<8x128xf32>
    %c0_12 = arith.constant 0 : index
    %c0_13 = arith.constant 0 : index
    %21 = vector.load %arg5[%c0_12, %c0_13] : memref<128x128xf32, #tpu.memory_space<vmem>>, vector<128x128xf32>
    %cst_14 = arith.constant dense<0.000000e+00> : vector<8x128xf32>
    %22 = tpu.matmul %20, %21, %cst_14 {dimension_numbers = #tpu.dot_dimension_numbers<[1], [0], [0], [1], [0, 0, 1, 1], [], []>} : vector<8x128xf32>, vector<128x128xf32>, vector<8x128xf32> -> vector<8x128xf32>
    %c2 = arith.constant 2 : index
    %c0_15 = arith.constant 0 : index
    %23 = vector.load %arg7[%c2, %c0_15] : memref<4x128xf32, #tpu.memory_space<vmem>>, vector<1x128xf32>
    %24 = vector.broadcast %23 : vector<1x128xf32> to vector<8x128xf32>
    %25 = arith.addf %22, %24 : vector<8x128xf32>
    %26 = math.tanh %25 : vector<8x128xf32>
    %c0_16 = arith.constant 0 : index
    %c0_17 = arith.constant 0 : index
    %27 = vector.load %arg6[%c0_16, %c0_17] : memref<128x128xf32, #tpu.memory_space<vmem>>, vector<128x128xf32>
    %cst_18 = arith.constant dense<0.000000e+00> : vector<8x128xf32>
    %28 = tpu.matmul %26, %27, %cst_18 {dimension_numbers = #tpu.dot_dimension_numbers<[1], [0], [0], [1], [0, 0, 1, 1], [], []>} : vector<8x128xf32>, vector<128x128xf32>, vector<8x128xf32> -> vector<8x128xf32>
    %c3 = arith.constant 3 : index
    %c0_19 = arith.constant 0 : index
    %29 = vector.load %arg7[%c3, %c0_19] : memref<4x128xf32, #tpu.memory_space<vmem>>, vector<1x128xf32>
    %30 = vector.broadcast %29 : vector<1x128xf32> to vector<8x128xf32>
    %31 = arith.addf %28, %30 : vector<8x128xf32>
    %32 = math.tanh %31 : vector<8x128xf32>
    %c0_20 = arith.constant 0 : index
    %c0_21 = arith.constant 0 : index
    %33 = vector.load %arg8[%c0_20, %c0_21] : memref<128x128xf32, #tpu.memory_space<vmem>>, vector<128x128xf32>
    %cst_22 = arith.constant dense<0.000000e+00> : vector<8x128xf32>
    %34 = tpu.matmul %32, %33, %cst_22 {dimension_numbers = #tpu.dot_dimension_numbers<[1], [0], [0], [1], [0, 0, 1, 1], [], []>} : vector<8x128xf32>, vector<128x128xf32>, vector<8x128xf32> -> vector<8x128xf32>
    %c0_23 = arith.constant 0 : index
    %c0_24 = arith.constant 0 : index
    %35 = vector.load %arg9[%c0_23, %c0_24] : memref<1x128xf32, #tpu.memory_space<vmem>>, vector<1x128xf32>
    %36 = vector.broadcast %35 : vector<1x128xf32> to vector<8x128xf32>
    %37 = arith.addf %34, %36 : vector<8x128xf32>
    %c0_25 = arith.constant 0 : index
    %c0_26 = arith.constant 0 : index
    %38 = vector.load %arg1[%c0_25, %c0_26] : memref<8x128xf32, #tpu.memory_space<vmem>>, vector<8x128xf32>
    %39 = arith.mulf %38, %37 : vector<8x128xf32>
    %cst_27 = arith.constant dense<0.000000e+00> : vector<8xf32>
    %40 = vector.multi_reduction <add>, %39, %cst_27 [1] : vector<8x128xf32> to vector<8xf32>
    %41 = vector.shape_cast %40 : vector<8xf32> to vector<8x1xf32>
    %42 = vector.shape_cast %41 : vector<8x1xf32> to vector<8x1xf32>
    %43 = vector.broadcast %42 : vector<8x1xf32> to vector<8x128xf32>
    %c0_28 = arith.constant 0 : index
    %c0_29 = arith.constant 0 : index
    %44 = vector.load %arg10[%c0_28, %c0_29] : memref<8x128xf32, #tpu.memory_space<vmem>>, vector<8x128xf32>
    tpu.vector_store %arg10[%c0_28, %c0_29], %43 {strides = array<i32>} : memref<8x128xf32, #tpu.memory_space<vmem>>, vector<8x128xf32>,
    return
  }
  func.func @transform_0(%arg0: i32) -> (i32, i32) {
    %c0_i32 = arith.constant 0 : i32
    %c0_i32_0 = arith.constant 0 : i32
    return %arg0, %c0_i32 : i32, i32
  }
  func.func @transform_1(%arg0: i32) -> (i32, i32) {
    %c0_i32 = arith.constant 0 : i32
    %c0_i32_0 = arith.constant 0 : i32
    return %arg0, %c0_i32 : i32, i32
  }
  func.func @transform_2(%arg0: i32) -> (i32, i32) {
    %c0_i32 = arith.constant 0 : i32
    %c0_i32_0 = arith.constant 0 : i32
    %c0_i32_1 = arith.constant 0 : i32
    return %c0_i32, %c0_i32_0 : i32, i32
  }
  func.func @transform_3(%arg0: i32) -> (i32, i32) {
    %c0_i32 = arith.constant 0 : i32
    %c0_i32_0 = arith.constant 0 : i32
    %c0_i32_1 = arith.constant 0 : i32
    return %c0_i32, %c0_i32_0 : i32, i32
  }
  func.func @transform_4(%arg0: i32) -> (i32, i32) {
    %c0_i32 = arith.constant 0 : i32
    %c0_i32_0 = arith.constant 0 : i32
    %c0_i32_1 = arith.constant 0 : i32
    return %c0_i32, %c0_i32_0 : i32, i32
  }
  func.func @transform_5(%arg0: i32) -> (i32, i32) {
    %c0_i32 = arith.constant 0 : i32
    %c0_i32_0 = arith.constant 0 : i32
    %c0_i32_1 = arith.constant 0 : i32
    return %c0_i32, %c0_i32_0 : i32, i32
  }
  func.func @transform_6(%arg0: i32) -> (i32, i32) {
    %c0_i32 = arith.constant 0 : i32
    %c0_i32_0 = arith.constant 0 : i32
    %c0_i32_1 = arith.constant 0 : i32
    return %c0_i32, %c0_i32_0 : i32, i32
  }
  func.func @transform_7(%arg0: i32) -> (i32, i32) {
    %c0_i32 = arith.constant 0 : i32
    %c0_i32_0 = arith.constant 0 : i32
    %c0_i32_1 = arith.constant 0 : i32
    return %c0_i32, %c0_i32_0 : i32, i32
  }
  func.func @transform_8(%arg0: i32) -> (i32, i32) {
    %c0_i32 = arith.constant 0 : i32
    %c0_i32_0 = arith.constant 0 : i32
    %c0_i32_1 = arith.constant 0 : i32
    return %c0_i32, %c0_i32_0 : i32, i32
  }
  func.func @transform_9(%arg0: i32) -> (i32, i32) {
    %c0_i32 = arith.constant 0 : i32
    %c0_i32_0 = arith.constant 0 : i32
    return %arg0, %c0_i32 : i32, i32
  }
}

</mosaic_0001>

<llo_original>
// kernel: possion_onet_forward.1
$region0: #{possion_onet_forward.1}
  #allocation0 [shape = 'u32[]', space=smem, size = 0x4, offset = 0x4, fixed_abs, tag = 'smem constant byte address 0x4 - core index']
  #allocation1 [shape = 'u32[144,128]{1,0:T(1,128)}', space=vmem, size = 0x12000, scoped, tag = 'internal scratch']
  %s0 = inlined_call_operand.vmem [shape: f32[8,128], index: 0, kind: input, shape index: {}]
  %s1 = inlined_call_operand.vmem [shape: f32[8,2], index: 1, kind: input, shape index: {}]
  %s2 = inlined_call_operand.vmem [shape: f32[2,128], index: 2, kind: input, shape index: {}]
  %s3 = inlined_call_operand.hbm [shape: f32[128,128], index: 3, kind: input, shape index: {}]
  %s4 = inlined_call_operand.hbm [shape: f32[128,128], index: 4, kind: input, shape index: {}]
  %s5 = inlined_call_operand.hbm [shape: f32[128,128], index: 5, kind: input, shape index: {}]
  %s6 = inlined_call_operand.vmem [shape: f32[4,128], index: 6, kind: input, shape index: {}]
  %s7 = inlined_call_operand.hbm [shape: f32[128,128], index: 7, kind: input, shape index: {}]
  %s8 = inlined_call_operand.vmem [shape: f32[1,128], index: 8, kind: input, shape index: {}]
  %s9 = inlined_call_operand.vmem [shape: f32[8,128], index: 9, kind: output, shape index: {}]
  %s10 = sld [smem:[#allocation0]]
  $region62: #{possion_onet_forward.1} parent=0
    _
  %s12 = ssub.s32 1, %s10
  %s13 = scalar_select 0, %s12, %s10
  $region1: #{possion_onet_forward.1} parent=0
    #allocation2 [shape = 'u8[65536]{0}', space=vmem, size = 0x10000, scoped, tag = 'input window, operand 3, single buffered']
    #allocation3 [shape = 's32[1]{0}', space=sflag, size = 0x4, scoped, tag = 'scoped memory for possion_onet_forward.1']
    #allocation4 [shape = 'u8[65536]{0}', space=vmem, size = 0x10000, scoped, tag = 'input window, operand 4, single buffered']
    #allocation5 [shape = 's32[1]{0}', space=sflag, size = 0x4, scoped, tag = 'scoped memory for possion_onet_forward.1']
    #allocation6 [shape = 'u8[65536]{0}', space=vmem, size = 0x10000, scoped, tag = 'input window, operand 5, single buffered']
    #allocation7 [shape = 'u8[65536]{0}', space=vmem, size = 0x10000, scoped, tag = 'input window, operand 7, single buffered']
    #allocation8 [shape = 's32[1]{0}', space=sflag, size = 0x4, scoped, tag = 'scoped memory for possion_onet_forward.1']
    %14 = vsyncpa [#allocation3], 0
    %15 = vsyncpa [#allocation5], 0
    %16 = vsyncpa [#allocation8], 0
    // Predicated region
    $region2: #{possion_onet_forward.1} parent=1 // pred_check
      _
    $region3: #{possion_onet_forward.1} parent=1 // pred_check_branch
      %18 = sbr.rel (0) target = $region5
    $region4: #{possion_onet_forward.1} parent=1 // pred_region
      _
    $region5: #{possion_onet_forward.1} parent=1 // pred_fallthru
      _
    // Predicated region
    $region6: #{possion_onet_forward.1} parent=1 // pred_check
      _
    $region7: #{possion_onet_forward.1} parent=1 // pred_check_branch
      %20 = sbr.rel (0) target = $region9
    $region8: #{possion_onet_forward.1} parent=1 // pred_region
      _
    $region9: #{possion_onet_forward.1} parent=1 // pred_fallthru
      _
    // Predicated region
    $region10: #{possion_onet_forward.1} parent=1 // pred_check
      _
    $region11: #{possion_onet_forward.1} parent=1 // pred_check_branch
      %22 = sbr.rel (0) target = $region13
    $region12: #{possion_onet_forward.1} parent=1 // pred_region
      _
    $region13: #{possion_onet_forward.1} parent=1 // pred_fallthru
      _
    // Predicated region
    $region14: #{possion_onet_forward.1} parent=1 // pred_check
      _
    $region15: #{possion_onet_forward.1} parent=1 // pred_check_branch
      %24 = sbr.rel (0) target = $region17
    $region16: #{possion_onet_forward.1} parent=1 // pred_region
      %s26 = ssub.s32 2048, 2048
      %27 = vsyncadd [#allocation3], %s26
      %s28 = sshll.u32 [#allocation2], 4
      %s29 = int_to_ptr.vmem [resolvable:$true] %s28
      %34 = dma.hbm_to_vmem [thread:$0]  %s3, 2048, %s29, [#allocation3], 128, 128, 8
    $region17: #{possion_onet_forward.1} parent=1 // pred_fallthru
      _
    // Predicated region
    $region18: #{possion_onet_forward.1} parent=1 // pred_check
      _
    $region19: #{possion_onet_forward.1} parent=1 // pred_check_branch
      %36 = sbr.rel (0) target = $region21
    $region20: #{possion_onet_forward.1} parent=1 // pred_region
      %s38 = ssub.s32 2048, 2048
      %39 = vsyncadd [#allocation5], %s38
      %s40 = sshll.u32 [#allocation4], 4
      %s41 = int_to_ptr.vmem [resolvable:$true] %s40
      %46 = dma.hbm_to_vmem [thread:$0]  %s4, 2048, %s41, [#allocation5], 128, 128, 8
    $region21: #{possion_onet_forward.1} parent=1 // pred_fallthru
      _
    // Predicated region
    $region22: #{possion_onet_forward.1} parent=1 // pred_check
      _
    $region23: #{possion_onet_forward.1} parent=1 // pred_check_branch
      %48 = sbr.rel (0) target = $region25
    $region24: #{possion_onet_forward.1} parent=1 // pred_region
      %s50 = ssub.s32 2048, 2048
      %51 = vsyncadd [#allocation5], %s50
      %s52 = sshll.u32 [#allocation6], 4
      %s53 = int_to_ptr.vmem [resolvable:$true] %s52
      %58 = dma.hbm_to_vmem [thread:$0]  %s5, 2048, %s53, [#allocation5], 128, 128, 8
    $region25: #{possion_onet_forward.1} parent=1 // pred_fallthru
      _
    // Predicated region
    $region26: #{possion_onet_forward.1} parent=1 // pred_check
      _
    $region27: #{possion_onet_forward.1} parent=1 // pred_check_branch
      %60 = sbr.rel (0) target = $region29
    $region28: #{possion_onet_forward.1} parent=1 // pred_region
      _
    $region29: #{possion_onet_forward.1} parent=1 // pred_fallthru
      _
    // Predicated region
    $region30: #{possion_onet_forward.1} parent=1 // pred_check
      _
    $region31: #{possion_onet_forward.1} parent=1 // pred_check_branch
      %62 = sbr.rel (0) target = $region33
    $region32: #{possion_onet_forward.1} parent=1 // pred_region
      %s64 = ssub.s32 2048, 2048
      %65 = vsyncadd [#allocation8], %s64
      %s66 = sshll.u32 [#allocation7], 4
      %s67 = int_to_ptr.vmem [resolvable:$true] %s66
      %72 = dma.hbm_to_vmem [thread:$0]  %s7, 2048, %s67, [#allocation8], 128, 128, 8
    $region33: #{possion_onet_forward.1} parent=1 // pred_fallthru
      _
    // Predicated region
    $region34: #{possion_onet_forward.1} parent=1 // pred_check
      _
    $region35: #{possion_onet_forward.1} parent=1 // pred_check_branch
      %74 = sbr.rel (0) target = $region37
    $region36: #{possion_onet_forward.1} parent=1 // pred_region
      _
    $region37: #{possion_onet_forward.1} parent=1 // pred_fallthru
      _
    // Predicated region
    $region38: #{possion_onet_forward.1} parent=1 // pred_check
      _
    $region39: #{possion_onet_forward.1} parent=1 // pred_check_branch
      %76 = sbr.rel (0) target = $region41
    $region40: #{possion_onet_forward.1} parent=1 // pred_region
      %77 = dma.done [#allocation3], 2048
    $region41: #{possion_onet_forward.1} parent=1 // pred_fallthru
      _
    // Predicated region
    $region42: #{possion_onet_forward.1} parent=1 // pred_check
      _
    $region43: #{possion_onet_forward.1} parent=1 // pred_check_branch
      %79 = sbr.rel (0) target = $region45
    $region44: #{possion_onet_forward.1} parent=1 // pred_region
      %80 = dma.done [#allocation5], 2048
    $region45: #{possion_onet_forward.1} parent=1 // pred_fallthru
      _
    // Predicated region
    $region46: #{possion_onet_forward.1} parent=1 // pred_check
      _
    $region47: #{possion_onet_forward.1} parent=1 // pred_check_branch
      %82 = sbr.rel (0) target = $region49
    $region48: #{possion_onet_forward.1} parent=1 // pred_region
      %83 = dma.done [#allocation5], 2048
    $region49: #{possion_onet_forward.1} parent=1 // pred_fallthru
      _
    // Predicated region
    $region50: #{possion_onet_forward.1} parent=1 // pred_check
      _
    $region51: #{possion_onet_forward.1} parent=1 // pred_check_branch
      %85 = sbr.rel (0) target = $region53
    $region52: #{possion_onet_forward.1} parent=1 // pred_region
      %86 = dma.done [#allocation8], 2048
    $region53: #{possion_onet_forward.1} parent=1 // pred_fallthru
      _
    %v87 = vld [vmem:[%s6] sm:$0x1]
    %v88 = vld [vmem:[%s1] sm:$0xff]
    %v89 = vld [vmem:[%s2] sm:$0x1]
    %91 = vset.pattern.permute.xlu0 0
    %92 = vperm.xlu0 %91, %v88
    %v93 = vpop.permute.xlu0 %92
    %v95 = vlaneseq
    %v96 = vshrl.u32 %v95, 7
    %v97 = vsub.s32 0, %v96
    %v98 = vrot.slane %v89, %v97
    %v99 = vmul.f32 %v93, %v98
    %v100 = vlaneseq
    %v101 = vshrl.u32 %v100, 7
    %v102 = vsub.s32 0, %v101
    %v103 = vrot.slane %v87, %v102
    %v104 = vadd.f32 %v103, %v99
    %v105 = vld [vmem:[%s2 + $0x1] sm:$0x1]
    %106 = vset.pattern.permute.xlu0 1
    %107 = vperm.xlu0 %106, %v88
    %v108 = vpop.permute.xlu0 %107
    %v110 = vlaneseq
    %v111 = vshrl.u32 %v110, 7
    %v112 = vsub.s32 0, %v111
    %v113 = vrot.slane %v105, %v112
    %v114 = vmul.f32 %v108, %v113
    %v115 = vadd.f32 %v104, %v114
    %v116 = vtanh.pop %v115
    %v117 = vld [vmem:[#allocation2] sm:$0xff]
    %v118 = vld [vmem:[#allocation2 + $0x8] sm:$0xff]
    %v119 = vld [vmem:[#allocation2 + $0x10] sm:$0xff]
    %v120 = vld [vmem:[#allocation2 + $0x18] sm:$0xff]
    %v121 = vld [vmem:[#allocation2 + $0x20] sm:$0xff]
    %v122 = vld [vmem:[#allocation2 + $0x28] sm:$0xff]
    %v123 = vld [vmem:[#allocation2 + $0x30] sm:$0xff]
    %v124 = vld [vmem:[#allocation2 + $0x38] sm:$0xff]
    %v125 = vld [vmem:[#allocation2 + $0x40] sm:$0xff]
    %v126 = vld [vmem:[#allocation2 + $0x48] sm:$0xff]
    %v127 = vld [vmem:[#allocation2 + $0x50] sm:$0xff]
    %v128 = vld [vmem:[#allocation2 + $0x58] sm:$0xff]
    %v129 = vld [vmem:[#allocation2 + $0x60] sm:$0xff]
    %v130 = vld [vmem:[#allocation2 + $0x68] sm:$0xff]
    %v131 = vld [vmem:[#allocation2 + $0x70] sm:$0xff]
    %v132 = vld [vmem:[#allocation2 + $0x78] sm:$0xff]
    %v133 = vld [vmem:[%s6 + $0x1] sm:$0x1]
    %v134 = vlaneseq
    %v135 = vshrl.u32 %v134, 7
    %v136 = vsub.s32 0, %v135
    %v137 = vrot.slane %v133, %v136
    %138 = vmatprep.subr.mxu0 0.0
    %139 = vmatpush1.msra.mxu0 %v117
    %140 = vmatprep.subr.mxu0 0.0
    %141 = vmatpush1.msra.mxu0 %v118
    %142 = vmatprep.subr.mxu0 0.0
    %143 = vmatpush1.msra.mxu0 %v119
    %144 = vmatprep.subr.mxu0 0.0
    %145 = vmatpush1.msra.mxu0 %v120
    %146 = vmatprep.subr.mxu0 0.0
    %147 = vmatpush1.msra.mxu0 %v121
    %148 = vmatprep.subr.mxu0 0.0
    %149 = vmatpush1.msra.mxu0 %v122
    %150 = vmatprep.subr.mxu0 0.0
    %151 = vmatpush1.msra.mxu0 %v123
    %152 = vmatprep.subr.mxu0 0.0
    %153 = vmatpush1.msra.mxu0 %v124
    %154 = vmatprep.subr.mxu0 0.0
    %155 = vmatpush1.msra.mxu0 %v125
    %156 = vmatprep.subr.mxu0 0.0
    %157 = vmatpush1.msra.mxu0 %v126
    %158 = vmatprep.subr.mxu0 0.0
    %159 = vmatpush1.msra.mxu0 %v127
    %160 = vmatprep.subr.mxu0 0.0
    %161 = vmatpush1.msra.mxu0 %v128
    %162 = vmatprep.subr.mxu0 0.0
    %163 = vmatpush1.msra.mxu0 %v129
    %164 = vmatprep.subr.mxu0 0.0
    %165 = vmatpush1.msra.mxu0 %v130
    %166 = vmatprep.subr.mxu0 0.0
    %167 = vmatpush1.msra.mxu0 %v131
    %168 = vmatprep.subr.mxu0 0.0
    %169 = vmatpush1.msra.mxu0 %v132
    %170 = vmatprep.subr.mxu0 0.0
    %171 = vmatpush1.msra.mxu0 0.0
    %172 = vmatprep.subr.mxu0 0.0
    %173 = vmatpush1.msra.mxu0 0.0
    %174 = vmatprep.subr.mxu0 0.0
    %175 = vmatpush1.msra.mxu0 0.0
    %176 = vmatprep.subr.mxu0 0.0
    %177 = vmatpush1.msra.mxu0 0.0
    %178 = vmatprep.subr.mxu0 0.0
    %179 = vmatpush1.msra.mxu0 0.0
    %180 = vmatprep.subr.mxu0 0.0
    %181 = vmatpush1.msra.mxu0 0.0
    %182 = vmatprep.subr.mxu0 0.0
    %183 = vmatpush1.msra.mxu0 0.0
    %184 = vmatprep.subr.mxu0 0.0
    %185 = vmatpush1.msra.mxu0 0.0
    %186 = vmatprep.subr.mxu0 0.0
    %187 = vmatpush1.msra.mxu0 0.0
    %188 = vmatprep.subr.mxu0 0.0
    %189 = vmatpush1.msra.mxu0 0.0
    %190 = vmatprep.subr.mxu0 0.0
    %191 = vmatpush1.msra.mxu0 0.0
    %192 = vmatprep.subr.mxu0 0.0
    %193 = vmatpush1.msra.mxu0 0.0
    %194 = vmatprep.subr.mxu0 0.0
    %195 = vmatpush1.msra.mxu0 0.0
    %196 = vmatprep.subr.mxu0 0.0
    %197 = vmatpush1.msra.mxu0 0.0
    %198 = vmatprep.subr.mxu0 0.0
    %199 = vmatpush1.msra.mxu0 0.0
    %200 = vmatprep.subr.mxu0 0.0
    %201 = vmatpush1.msra.mxu0 0.0
    %202 = vmatprep.mubr.f32.mxu0 0.0
    %203 = vmatmul.mubr.f32.gmra.mrb[0].mxu0 %v116
    %v204 = vpop.f32.mrb[0].mxu0
    %v205 = vadd.f32 %v137, %v204
    %v206 = vpop.f32.mrb[0].mxu0
    %207 = vdwg.mxu0
    %v208 = vtanh.pop %v205
    %v209 = vld [vmem:[#allocation4] sm:$0xff]
    %v210 = vld [vmem:[#allocation4 + $0x8] sm:$0xff]
    %v211 = vld [vmem:[#allocation4 + $0x10] sm:$0xff]
    %v212 = vld [vmem:[#allocation4 + $0x18] sm:$0xff]
    %v213 = vld [vmem:[#allocation4 + $0x20] sm:$0xff]
    %v214 = vld [vmem:[#allocation4 + $0x28] sm:$0xff]
    %v215 = vld [vmem:[#allocation4 + $0x30] sm:$0xff]
    %v216 = vld [vmem:[#allocation4 + $0x38] sm:$0xff]
    %v217 = vld [vmem:[#allocation4 + $0x40] sm:$0xff]
    %v218 = vld [vmem:[#allocation4 + $0x48] sm:$0xff]
    %v219 = vld [vmem:[#allocation4 + $0x50] sm:$0xff]
    %v220 = vld [vmem:[#allocation4 + $0x58] sm:$0xff]
    %v221 = vld [vmem:[#allocation4 + $0x60] sm:$0xff]
    %v222 = vld [vmem:[#allocation4 + $0x68] sm:$0xff]
    %v223 = vld [vmem:[#allocation4 + $0x70] sm:$0xff]
    %v224 = vld [vmem:[#allocation4 + $0x78] sm:$0xff]
    %v225 = vld [vmem:[%s6 + $0x2] sm:$0x1]
    %v226 = vlaneseq
    %v227 = vshrl.u32 %v226, 7
    %v228 = vsub.s32 0, %v227
    %v229 = vrot.slane %v225, %v228
    %230 = vmatprep.subr.mxu0 0.0
    %231 = vmatpush1.msra.mxu0 %v209
    %232 = vmatprep.subr.mxu0 0.0
    %233 = vmatpush1.msra.mxu0 %v210
    %234 = vmatprep.subr.mxu0 0.0
    %235 = vmatpush1.msra.mxu0 %v211
    %236 = vmatprep.subr.mxu0 0.0
    %237 = vmatpush1.msra.mxu0 %v212
    %238 = vmatprep.subr.mxu0 0.0
    %239 = vmatpush1.msra.mxu0 %v213
    %240 = vmatprep.subr.mxu0 0.0
    %241 = vmatpush1.msra.mxu0 %v214
    %242 = vmatprep.subr.mxu0 0.0
    %243 = vmatpush1.msra.mxu0 %v215
    %244 = vmatprep.subr.mxu0 0.0
    %245 = vmatpush1.msra.mxu0 %v216
    %246 = vmatprep.subr.mxu0 0.0
    %247 = vmatpush1.msra.mxu0 %v217
    %248 = vmatprep.subr.mxu0 0.0
    %249 = vmatpush1.msra.mxu0 %v218
    %250 = vmatprep.subr.mxu0 0.0
    %251 = vmatpush1.msra.mxu0 %v219
    %252 = vmatprep.subr.mxu0 0.0
    %253 = vmatpush1.msra.mxu0 %v220
    %254 = vmatprep.subr.mxu0 0.0
    %255 = vmatpush1.msra.mxu0 %v221
    %256 = vmatprep.subr.mxu0 0.0
    %257 = vmatpush1.msra.mxu0 %v222
    %258 = vmatprep.subr.mxu0 0.0
    %259 = vmatpush1.msra.mxu0 %v223
    %260 = vmatprep.subr.mxu0 0.0
    %261 = vmatpush1.msra.mxu0 %v224
    %262 = vmatprep.subr.mxu0 0.0
    %263 = vmatpush1.msra.mxu0 0.0
    %264 = vmatprep.subr.mxu0 0.0
    %265 = vmatpush1.msra.mxu0 0.0
    %266 = vmatprep.subr.mxu0 0.0
    %267 = vmatpush1.msra.mxu0 0.0
    %268 = vmatprep.subr.mxu0 0.0
    %269 = vmatpush1.msra.mxu0 0.0
    %270 = vmatprep.subr.mxu0 0.0
    %271 = vmatpush1.msra.mxu0 0.0
    %272 = vmatprep.subr.mxu0 0.0
    %273 = vmatpush1.msra.mxu0 0.0
    %274 = vmatprep.subr.mxu0 0.0
    %275 = vmatpush1.msra.mxu0 0.0
    %276 = vmatprep.subr.mxu0 0.0
    %277 = vmatpush1.msra.mxu0 0.0
    %278 = vmatprep.subr.mxu0 0.0
    %279 = vmatpush1.msra.mxu0 0.0
    %280 = vmatprep.subr.mxu0 0.0
    %281 = vmatpush1.msra.mxu0 0.0
    %282 = vmatprep.subr.mxu0 0.0
    %283 = vmatpush1.msra.mxu0 0.0
    %284 = vmatprep.subr.mxu0 0.0
    %285 = vmatpush1.msra.mxu0 0.0
    %286 = vmatprep.subr.mxu0 0.0
    %287 = vmatpush1.msra.mxu0 0.0
    %288 = vmatprep.subr.mxu0 0.0
    %289 = vmatpush1.msra.mxu0 0.0
    %290 = vmatprep.subr.mxu0 0.0
    %291 = vmatpush1.msra.mxu0 0.0
    %292 = vmatprep.subr.mxu0 0.0
    %293 = vmatpush1.msra.mxu0 0.0
    %294 = vmatprep.mubr.f32.mxu0 0.0
    %295 = vmatmul.mubr.f32.gmra.mrb[0].mxu0 %v208
    %v296 = vpop.f32.mrb[0].mxu0
    %v297 = vadd.f32 %v229, %v296
    %v298 = vpop.f32.mrb[0].mxu0
    %299 = vdwg.mxu0
    %v300 = vtanh.pop %v297
    %v301 = vld [vmem:[#allocation6] sm:$0xff]
    %v302 = vld [vmem:[#allocation6 + $0x8] sm:$0xff]
    %v303 = vld [vmem:[#allocation6 + $0x10] sm:$0xff]
    %v304 = vld [vmem:[#allocation6 + $0x18] sm:$0xff]
    %v305 = vld [vmem:[#allocation6 + $0x20] sm:$0xff]
    %v306 = vld [vmem:[#allocation6 + $0x28] sm:$0xff]
    %v307 = vld [vmem:[#allocation6 + $0x30] sm:$0xff]
    %v308 = vld [vmem:[#allocation6 + $0x38] sm:$0xff]
    %v309 = vld [vmem:[#allocation6 + $0x40] sm:$0xff]
    %v310 = vld [vmem:[#allocation6 + $0x48] sm:$0xff]
    %v311 = vld [vmem:[#allocation6 + $0x50] sm:$0xff]
    %v312 = vld [vmem:[#allocation6 + $0x58] sm:$0xff]
    %v313 = vld [vmem:[#allocation6 + $0x60] sm:$0xff]
    %v314 = vld [vmem:[#allocation6 + $0x68] sm:$0xff]
    %v315 = vld [vmem:[#allocation6 + $0x70] sm:$0xff]
    %v316 = vld [vmem:[#allocation6 + $0x78] sm:$0xff]
    %v317 = vld [vmem:[%s6 + $0x3] sm:$0x1]
    %v318 = vlaneseq
    %v319 = vshrl.u32 %v318, 7
    %v320 = vsub.s32 0, %v319
    %v321 = vrot.slane %v317, %v320
    %322 = vmatprep.subr.mxu0 0.0
    %323 = vmatpush1.msra.mxu0 %v301
    %324 = vmatprep.subr.mxu0 0.0
    %325 = vmatpush1.msra.mxu0 %v302
    %326 = vmatprep.subr.mxu0 0.0
    %327 = vmatpush1.msra.mxu0 %v303
    %328 = vmatprep.subr.mxu0 0.0
    %329 = vmatpush1.msra.mxu0 %v304
    %330 = vmatprep.subr.mxu0 0.0
    %331 = vmatpush1.msra.mxu0 %v305
    %332 = vmatprep.subr.mxu0 0.0
    %333 = vmatpush1.msra.mxu0 %v306
    %334 = vmatprep.subr.mxu0 0.0
    %335 = vmatpush1.msra.mxu0 %v307
    %336 = vmatprep.subr.mxu0 0.0
    %337 = vmatpush1.msra.mxu0 %v308
    %338 = vmatprep.subr.mxu0 0.0
    %339 = vmatpush1.msra.mxu0 %v309
    %340 = vmatprep.subr.mxu0 0.0
    %341 = vmatpush1.msra.mxu0 %v310
    %342 = vmatprep.subr.mxu0 0.0
    %343 = vmatpush1.msra.mxu0 %v311
    %344 = vmatprep.subr.mxu0 0.0
    %345 = vmatpush1.msra.mxu0 %v312
    %346 = vmatprep.subr.mxu0 0.0
    %347 = vmatpush1.msra.mxu0 %v313
    %348 = vmatprep.subr.mxu0 0.0
    %349 = vmatpush1.msra.mxu0 %v314
    %350 = vmatprep.subr.mxu0 0.0
    %351 = vmatpush1.msra.mxu0 %v315
    %352 = vmatprep.subr.mxu0 0.0
    %353 = vmatpush1.msra.mxu0 %v316
    %354 = vmatprep.subr.mxu0 0.0
    %355 = vmatpush1.msra.mxu0 0.0
    %356 = vmatprep.subr.mxu0 0.0
    %357 = vmatpush1.msra.mxu0 0.0
    %358 = vmatprep.subr.mxu0 0.0
    %359 = vmatpush1.msra.mxu0 0.0
    %360 = vmatprep.subr.mxu0 0.0
    %361 = vmatpush1.msra.mxu0 0.0
    %362 = vmatprep.subr.mxu0 0.0
    %363 = vmatpush1.msra.mxu0 0.0
    %364 = vmatprep.subr.mxu0 0.0
    %365 = vmatpush1.msra.mxu0 0.0
    %366 = vmatprep.subr.mxu0 0.0
    %367 = vmatpush1.msra.mxu0 0.0
    %368 = vmatprep.subr.mxu0 0.0
    %369 = vmatpush1.msra.mxu0 0.0
    %370 = vmatprep.subr.mxu0 0.0
    %371 = vmatpush1.msra.mxu0 0.0
    %372 = vmatprep.subr.mxu0 0.0
    %373 = vmatpush1.msra.mxu0 0.0
    %374 = vmatprep.subr.mxu0 0.0
    %375 = vmatpush1.msra.mxu0 0.0
    %376 = vmatprep.subr.mxu0 0.0
    %377 = vmatpush1.msra.mxu0 0.0
    %378 = vmatprep.subr.mxu0 0.0
    %379 = vmatpush1.msra.mxu0 0.0
    %380 = vmatprep.subr.mxu0 0.0
    %381 = vmatpush1.msra.mxu0 0.0
    %382 = vmatprep.subr.mxu0 0.0
    %383 = vmatpush1.msra.mxu0 0.0
    %384 = vmatprep.subr.mxu0 0.0
    %385 = vmatpush1.msra.mxu0 0.0
    %386 = vmatprep.mubr.f32.mxu0 0.0
    %387 = vmatmul.mubr.f32.gmra.mrb[0].mxu0 %v300
    %v388 = vpop.f32.mrb[0].mxu0
    %v389 = vadd.f32 %v321, %v388
    %v390 = vpop.f32.mrb[0].mxu0
    %391 = vdwg.mxu0
    %v392 = vtanh.pop %v389
    %v393 = vld [vmem:[#allocation7] sm:$0xff]
    %v394 = vld [vmem:[#allocation7 + $0x8] sm:$0xff]
    %v395 = vld [vmem:[#allocation7 + $0x10] sm:$0xff]
    %v396 = vld [vmem:[#allocation7 + $0x18] sm:$0xff]
    %v397 = vld [vmem:[#allocation7 + $0x20] sm:$0xff]
    %v398 = vld [vmem:[#allocation7 + $0x28] sm:$0xff]
    %v399 = vld [vmem:[#allocation7 + $0x30] sm:$0xff]
    %v400 = vld [vmem:[#allocation7 + $0x38] sm:$0xff]
    %v401 = vld [vmem:[#allocation7 + $0x40] sm:$0xff]
    %v402 = vld [vmem:[#allocation7 + $0x48] sm:$0xff]
    %v403 = vld [vmem:[#allocation7 + $0x50] sm:$0xff]
    %v404 = vld [vmem:[#allocation7 + $0x58] sm:$0xff]
    %v405 = vld [vmem:[#allocation7 + $0x60] sm:$0xff]
    %v406 = vld [vmem:[#allocation7 + $0x68] sm:$0xff]
    %v407 = vld [vmem:[#allocation7 + $0x70] sm:$0xff]
    %v408 = vld [vmem:[#allocation7 + $0x78] sm:$0xff]
    %v409 = vld [vmem:[%s8] sm:$0x1]
    %v411 = vlaneseq
    %v412 = vshrl.u32 %v411, 7
    %v413 = vsub.s32 0, %v412
    %v414 = vrot.slane %v409, %v413
    %416 = vmatprep.subr.mxu0 0.0
    %417 = vmatpush1.msra.mxu0 %v393
    %418 = vmatprep.subr.mxu0 0.0
    %419 = vmatpush1.msra.mxu0 %v394
    %420 = vmatprep.subr.mxu0 0.0
    %421 = vmatpush1.msra.mxu0 %v395
    %422 = vmatprep.subr.mxu0 0.0
    %423 = vmatpush1.msra.mxu0 %v396
    %424 = vmatprep.subr.mxu0 0.0
    %425 = vmatpush1.msra.mxu0 %v397
    %426 = vmatprep.subr.mxu0 0.0
    %427 = vmatpush1.msra.mxu0 %v398
    %428 = vmatprep.subr.mxu0 0.0
    %429 = vmatpush1.msra.mxu0 %v399
    %430 = vmatprep.subr.mxu0 0.0
    %431 = vmatpush1.msra.mxu0 %v400
    %432 = vmatprep.subr.mxu0 0.0
    %433 = vmatpush1.msra.mxu0 %v401
    %434 = vmatprep.subr.mxu0 0.0
    %435 = vmatpush1.msra.mxu0 %v402
    %436 = vmatprep.subr.mxu0 0.0
    %437 = vmatpush1.msra.mxu0 %v403
    %438 = vmatprep.subr.mxu0 0.0
    %439 = vmatpush1.msra.mxu0 %v404
    %440 = vmatprep.subr.mxu0 0.0
    %441 = vmatpush1.msra.mxu0 %v405
    %442 = vmatprep.subr.mxu0 0.0
    %443 = vmatpush1.msra.mxu0 %v406
    %444 = vmatprep.subr.mxu0 0.0
    %445 = vmatpush1.msra.mxu0 %v407
    %446 = vmatprep.subr.mxu0 0.0
    %447 = vmatpush1.msra.mxu0 %v408
    %448 = vmatprep.subr.mxu0 0.0
    %449 = vmatpush1.msra.mxu0 0.0
    %450 = vmatprep.subr.mxu0 0.0
    %451 = vmatpush1.msra.mxu0 0.0
    %452 = vmatprep.subr.mxu0 0.0
    %453 = vmatpush1.msra.mxu0 0.0
    %454 = vmatprep.subr.mxu0 0.0
    %455 = vmatpush1.msra.mxu0 0.0
    %456 = vmatprep.subr.mxu0 0.0
    %457 = vmatpush1.msra.mxu0 0.0
    %458 = vmatprep.subr.mxu0 0.0
    %459 = vmatpush1.msra.mxu0 0.0
    %460 = vmatprep.subr.mxu0 0.0
    %461 = vmatpush1.msra.mxu0 0.0
    %462 = vmatprep.subr.mxu0 0.0
    %463 = vmatpush1.msra.mxu0 0.0
    %464 = vmatprep.subr.mxu0 0.0
    %465 = vmatpush1.msra.mxu0 0.0
    %466 = vmatprep.subr.mxu0 0.0
    %467 = vmatpush1.msra.mxu0 0.0
    %468 = vmatprep.subr.mxu0 0.0
    %469 = vmatpush1.msra.mxu0 0.0
    %470 = vmatprep.subr.mxu0 0.0
    %471 = vmatpush1.msra.mxu0 0.0
    %472 = vmatprep.subr.mxu0 0.0
    %473 = vmatpush1.msra.mxu0 0.0
    %474 = vmatprep.subr.mxu0 0.0
    %475 = vmatpush1.msra.mxu0 0.0
    %476 = vmatprep.subr.mxu0 0.0
    %477 = vmatpush1.msra.mxu0 0.0
    %478 = vmatprep.subr.mxu0 0.0
    %479 = vmatpush1.msra.mxu0 0.0
    %480 = vmatprep.mubr.f32.mxu0 0.0
    %481 = vmatmul.mubr.f32.gmra.mrb[0].mxu0 %v392
    %v482 = vpop.f32.mrb[0].mxu0
    %v483 = vadd.f32 %v414, %v482
    %v484 = vpop.f32.mrb[0].mxu0
    %485 = vdwg.mxu0
    %v486 = vld [vmem:[%s0] sm:$0xff]
    %v487 = vmul.f32 %v486, %v483
    %488 = vadd.xlane.f32.xlu0 %v487
    %v489 = vpop.xlane.xlu0 %488
    %490 = vst [vmem:[%s9] sm:$0xff] %v489
    // Predicated region
    $region54: #{possion_onet_forward.1} parent=1 // pred_check
      _
    $region55: #{possion_onet_forward.1} parent=1 // pred_check_branch
      %492 = sbr.rel (0) target = $region57
    $region56: #{possion_onet_forward.1} parent=1 // pred_region
      _
    $region57: #{possion_onet_forward.1} parent=1 // pred_fallthru
      _
    // Predicated region
    $region58: #{possion_onet_forward.1} parent=1 // pred_check
      _
    $region59: #{possion_onet_forward.1} parent=1 // pred_check_branch
      %494 = sbr.rel (0) target = $region61
    $region60: #{possion_onet_forward.1} parent=1 // pred_region
      _
    $region61: #{possion_onet_forward.1} parent=1 // pred_fallthru
      _
    %495 = vsyncpa [#allocation3], 1
    %496 = vsyncpa [#allocation5], 1
    %497 = vsyncpa [#allocation8], 1

</llo_original>
